<compile_context>
chip_gen: v6e
topology: v6e:2x2x1
jax: 0.10.0
libtpu: 0.0.40
codegen_flags: <defaults>
</compile_context>

<pallas_src>
import math

import jax
import jax.numpy as jnp
from jax.experimental import pallas as pl
from jax.experimental.pallas import tpu as pltpu

ALPHA = 0.25          # focal-loss alpha
GAMMA = 2.0           # focal-loss gamma (hard-coded as q*q below)
LAMBDA = 2.0          # deterministic stand-in for cfg.TRAIN.LAMBDA


def _round_up(x, m):
    return ((x + m - 1) // m) * m


def _proposal_loss_kernel(p_cls_ref, g_cls_ref, m_cls_ref,
                          p_reg_ref, g_reg_ref, m_reg_ref,
                          part_ref):
    # ------------- classification branch (sigmoid focal loss) --------------
    x = p_cls_ref[...].astype(jnp.float32)      # (B*C, T) logits
    t = g_cls_ref[...].astype(jnp.float32)      # (B*C, T) binary targets
    mc = m_cls_ref[...].astype(jnp.float32)     # (B*C, T) binary mask

    # single exp feeds both the stable sigmoid and the stable BCE-with-logits
    e = jnp.exp(-jnp.abs(x))                    # exp(-|x|)
    inv = 1.0 / (1.0 + e)
    p = jnp.where(x >= 0, 1.0, e) * inv         # sigmoid(x)
    ce = jnp.maximum(x, 0.0) - x * t + jnp.log1p(e)

    p_t = p * t + (1.0 - p) * (1.0 - t)
    q = 1.0 - p_t
    alpha_t = ALPHA * t + (1.0 - ALPHA) * (1.0 - t)
    fl = (alpha_t * ce) * (q * q)               # gamma == 2.0
    cls_p = jnp.sum(fl * mc)

    # ------------------ regression branch (smooth L1) ----------------------
    pr = p_reg_ref[...].astype(jnp.float32)     # (B, 7, T)
    gr = g_reg_ref[...].astype(jnp.float32)     # (B, 7, T)
    mr = m_reg_ref[...].astype(jnp.float32)     # (B, 1, T)

    d = pr - gr
    ad = jnp.abs(d)
    sl1 = jnp.where(ad < 1.0, 0.5 * d * d, ad - 0.5)     # smooth_l1, beta=1

    # [3, 3, 1] split along the sublane (box-param) axis; yaw / pi broadcasts
    # across the 3-wide xyz+wlh terms exactly like the torch code.
    total = sl1[:, 0:3, :] + sl1[:, 3:6, :] + sl1[:, 6:7, :] * (1.0 / math.pi)
    reg_p = jnp.sum(total * mr)                 # mask broadcasts over 3
    norm_p = jnp.sum(mr)

    # ---------------- per-block partials (lanes 0/1/2) ---------------------
    lane = jax.lax.broadcasted_iota(jnp.int32, part_ref.shape, 2)
    part_ref[...] = (jnp.where(lane == 0, cls_p, 0.0)
                     + jnp.where(lane == 1, reg_p, 0.0)
                     + jnp.where(lane == 2, norm_p, 0.0))


def proposal_loss(item, *, lam=LAMBDA, tile_na=None):
    """item: dict with G_cls, M_cls, P_cls of shape (B, NA, C) and
    G_reg, P_reg of shape (B, NA, 7), M_reg of shape (B, NA, 1).
    Inputs may be any float/int dtype; math is done in f32 inside the kernel."""
    P_cls, G_cls, M_cls = item["P_cls"], item["G_cls"], item["M_cls"]
    P_reg, G_reg, M_reg = item["P_reg"], item["G_reg"], item["M_reg"]

    B, NA, C = P_cls.shape
    assert P_reg.shape == (B, NA, 7) and M_reg.shape == (B, NA, 1)

    # ---- tile sizing: double-buffered working set <= ~8 MiB (fits the scoped
    # VMEM defaults of v5e/v6e/v7x; re-tune per generation if desired). -------
    bytes_per_lane = 4 * (3 * B * C + 15 * B)        # f32-equivalent, P+G+M
    budget = 8 * 1024 * 1024
    max_tile = max(128, (budget // (2 * bytes_per_lane)) // 128 * 128)
    if tile_na is None:
        tile = min(_round_up(NA, 128), min(max_tile, 8192))
    else:
        tile = _round_up(int(tile_na), 128)

    NA_pad = _round_up(NA, tile)
    num_blocks = NA_pad // tile
    pad = NA_pad - NA

    def pad_na(x):                    # zero-pad the anchor axis (masks are 0
        if pad == 0:                  # there, so padded anchors contribute 0)
            return x
        return jnp.pad(x, ((0, 0), (0, pad), (0, 0)))

    # ---- layout glue: anchors -> lane (last) axis --------------------------
    def cls_2d(x):                    # (B, NA, C) -> (B*C, NA)   (free if C==1)
        return jnp.moveaxis(pad_na(x), -1, 1).reshape(B * C, NA_pad)

    def reg_3d(x):                    # (B, NA, K) -> (B, K, NA)
        return jnp.moveaxis(pad_na(x), -1, 1)

    p_cls, g_cls, m_cls = cls_2d(P_cls), cls_2d(G_cls), cls_2d(M_cls)
    p_reg, g_reg, m_reg = reg_3d(P_reg), reg_3d(G_reg), reg_3d(M_reg)

    in_specs = [
        pl.BlockSpec((B * C, tile), lambda i: (0, i)),      # P_cls
        pl.BlockSpec((B * C, tile), lambda i: (0, i)),      # G_cls
        pl.BlockSpec((B * C, tile), lambda i: (0, i)),      # M_cls
        pl.BlockSpec((B, 7, tile), lambda i: (0, 0, i)),    # P_reg
        pl.BlockSpec((B, 7, tile), lambda i: (0, 0, i)),    # G_reg
        pl.BlockSpec((B, 1, tile), lambda i: (0, 0, i)),    # M_reg
    ]
    out_spec = pl.BlockSpec((1, 8, 128), lambda i: (i, 0, 0))

    # advisory cost hint for XLA's scheduler
    n_cls = B * C * NA_pad
    n_reg = B * 7 * NA_pad
    in_bytes = sum(int(a.size) * a.dtype.itemsize
                   for a in (p_cls, g_cls, m_cls, p_reg, g_reg, m_reg))
    cost = pl.CostEstimate(
        flops=int(24 * n_cls + 10 * n_reg),
        transcendentals=int(2 * n_cls),
        bytes_accessed=int(in_bytes + num_blocks * 8 * 128 * 4),
    )

    partials = pl.pallas_call(
        _proposal_loss_kernel,
        out_shape=jax.ShapeDtypeStruct((num_blocks, 8, 128), jnp.float32),
        grid=(num_blocks,),
        in_specs=in_specs,
        out_specs=out_spec,
        compiler_params=pltpu.CompilerParams(
            dimension_semantics=("parallel",)),
        cost_estimate=cost,
    )(p_cls, g_cls, m_cls, p_reg, g_reg, m_reg)

    # ---- tiny epilogue: combine per-block partials -------------------------
    sums = jnp.sum(partials[:, 0, :], axis=0)       # (128,)
    cls_sum, reg_sum, norm_sum = sums[0], sums[1], sums[2]
    normalizer = jnp.maximum(norm_sum, 1.0)
    cls_loss = cls_sum / normalizer
    reg_loss = reg_sum / normalizer
    return dict(cls_loss=cls_loss, reg_loss=reg_loss,
                loss=cls_loss + lam * reg_loss)


# --------------------------- pure-JAX reference --------------------------- #
def _reference(item):
    G_cls = item["G_cls"].astype(jnp.float32)
    M_cls = item["M_cls"].astype(jnp.float32)
    P_cls = item["P_cls"].astype(jnp.float32)
    G_reg = item["G_reg"].astype(jnp.float32)
    M_reg = item["M_reg"].astype(jnp.float32)
    P_reg = item["P_reg"].astype(jnp.float32)

    p = jax.nn.sigmoid(P_cls)
    ce = jnp.maximum(P_cls, 0.0) - P_cls * G_cls + jnp.log1p(jnp.exp(-jnp.abs(P_cls)))
    p_t = p * G_cls + (1 - p) * (1 - G_cls)
    fl = ALPHA * G_cls + (1 - ALPHA) * (1 - G_cls)
    fl = fl * ce * (1 - p_t) ** GAMMA
    cls_sum = jnp.sum(fl * M_cls)

    d = P_reg - G_reg
    sl1 = jnp.where(jnp.abs(d) < 1.0, 0.5 * d * d, jnp.abs(d) - 0.5)
    total = sl1[..., 0:3] + sl1[..., 3:6] + sl1[..., 6:7] / math.pi
    reg_sum = jnp.sum(total * M_reg)

    norm = jnp.maximum(jnp.sum(M_reg), 1.0)
    cls_loss = cls_sum / norm
    reg_loss = reg_sum / norm
    return dict(cls_loss=cls_loss, reg_loss=reg_loss,
                loss=cls_loss + LAMBDA * reg_loss)


if __name__ == "__main__":
    key = jax.random.PRNGKey(0)
    k1, k2, k3, k4, k5, k6 = jax.random.split(key, 6)

    B, NA, C = 2, 384, 2   # batch, anchors, classes
    item = {
        "P_cls": jax.random.normal(k1, (B, NA, C), jnp.float32),
        "G_cls": jax.random.bernoulli(k2, 0.3, (B, NA, C)).astype(jnp.float32),
        "M_cls": jax.random.bernoulli(k3, 0.8, (B, NA, C)).astype(jnp.float32),
        "P_reg": jax.random.normal(k4, (B, NA, 7), jnp.float32),
        "G_reg": jax.random.normal(k5, (B, NA, 7), jnp.float32),
        "M_reg": jax.random.bernoulli(k6, 0.3, (B, NA, 1)).astype(jnp.float32),
    }

    ref = _reference(item)

    # default tiling: single block covers all 384 anchors
    out1 = proposal_loss(item)
    jax.block_until_ready(out1)

    # forced small tile: exercises the multi-block grid + zero-padding path
    out2 = proposal_loss(item, tile_na=256)   # NA padded 384 -> 512, 2 blocks
    jax.block_until_ready(out2)

    for out in (out1, out2):
        for k in ("cls_loss", "reg_loss", "loss"):
            assert jnp.allclose(out[k], ref[k], rtol=1e-5, atol=1e-5), (
                k, out[k], ref[k])

    print("KERNEL_OK")
</pallas_src>

<mosaic_0001>
module attributes {stable_mosaic.version = 11 : i64} {
  func.func @_proposal_loss_kernel(%arg0: i32, %arg1: memref<4x384xf32, #tpu.memory_space<vmem>>, %arg2: memref<4x384xf32, #tpu.memory_space<vmem>>, %arg3: memref<4x384xf32, #tpu.memory_space<vmem>>, %arg4: memref<2x7x384xf32, #tpu.memory_space<vmem>>, %arg5: memref<2x7x384xf32, #tpu.memory_space<vmem>>, %arg6: memref<2x1x384xf32, #tpu.memory_space<vmem>>, %arg7: memref<1x8x128xf32, #tpu.memory_space<vmem>>) attributes {dimension_semantics = [#tpu.dimension_semantics<parallel>], iteration_bounds = array<i64: 1>, scalar_prefetch = 0 : i64, scratch_operands = 0 : i64, tpu.core_type = #tpu.core_type<tc>, window_params = [{transform_indices = @transform_0, window_bounds = array<i64: 4, 384>}, {transform_indices = @transform_1, window_bounds = array<i64: 4, 384>}, {transform_indices = @transform_2, window_bounds = array<i64: 4, 384>}, {transform_indices = @transform_3, window_bounds = array<i64: 2, 7, 384>}, {transform_indices = @transform_4, window_bounds = array<i64: 2, 7, 384>}, {transform_indices = @transform_5, window_bounds = array<i64: 2, 1, 384>}, {transform_indices = @transform_6, window_bounds = array<i64: 1, 8, 128>}]} {
    %c0 = arith.constant 0 : index
    %c0_0 = arith.constant 0 : index
    %0 = vector.load %arg1[%c0, %c0_0] : memref<4x384xf32, #tpu.memory_space<vmem>>, vector<4x384xf32>
    %c0_1 = arith.constant 0 : index
    %c0_2 = arith.constant 0 : index
    %1 = vector.load %arg2[%c0_1, %c0_2] : memref<4x384xf32, #tpu.memory_space<vmem>>, vector<4x384xf32>
    %c0_3 = arith.constant 0 : index
    %c0_4 = arith.constant 0 : index
    %2 = vector.load %arg3[%c0_3, %c0_4] : memref<4x384xf32, #tpu.memory_space<vmem>>, vector<4x384xf32>
    %3 = math.absf %0 : vector<4x384xf32>
    %cst = arith.constant 0.000000e+00 : f32
    %4 = vector.broadcast %cst : f32 to vector<4x384xf32>
    %5 = arith.subf %4, %3 : vector<4x384xf32>
    %6 = math.exp %5 : vector<4x384xf32>
    %cst_5 = arith.constant 1.000000e+00 : f32
    %7 = vector.broadcast %cst_5 : f32 to vector<4x384xf32>
    %8 = arith.addf %7, %6 : vector<4x384xf32>
    %cst_6 = arith.constant 1.000000e+00 : f32
    %9 = vector.broadcast %cst_6 : f32 to vector<4x384xf32>
    %10 = arith.divf %9, %8 : vector<4x384xf32>
    %cst_7 = arith.constant 0.000000e+00 : f32
    %11 = vector.broadcast %cst_7 : f32 to vector<4x384xf32>
    %12 = arith.cmpf oge, %0, %11 : vector<4x384xf32>
    %cst_8 = arith.constant 1.000000e+00 : f32
    %13 = vector.broadcast %cst_8 : f32 to vector<4x384xf32>
    %14 = arith.select %12, %13, %6 : vector<4x384xi1>, vector<4x384xf32>
    %15 = arith.mulf %14, %10 : vector<4x384xf32>
    %cst_9 = arith.constant 0.000000e+00 : f32
    %16 = vector.broadcast %cst_9 : f32 to vector<4x384xf32>
    %17 = arith.maximumf %0, %16 : vector<4x384xf32>
    %18 = arith.mulf %0, %1 : vector<4x384xf32>
    %19 = arith.subf %17, %18 : vector<4x384xf32>
    %20 = math.log1p %6 : vector<4x384xf32>
    %21 = arith.addf %19, %20 : vector<4x384xf32>
    %22 = arith.mulf %15, %1 : vector<4x384xf32>
    %cst_10 = arith.constant 1.000000e+00 : f32
    %23 = vector.broadcast %cst_10 : f32 to vector<4x384xf32>
    %24 = arith.subf %23, %15 : vector<4x384xf32>
    %cst_11 = arith.constant 1.000000e+00 : f32
    %25 = vector.broadcast %cst_11 : f32 to vector<4x384xf32>
    %26 = arith.subf %25, %1 : vector<4x384xf32>
    %27 = arith.mulf %24, %26 : vector<4x384xf32>
    %28 = arith.addf %22, %27 : vector<4x384xf32>
    %cst_12 = arith.constant 1.000000e+00 : f32
    %29 = vector.broadcast %cst_12 : f32 to vector<4x384xf32>
    %30 = arith.subf %29, %28 : vector<4x384xf32>
    %cst_13 = arith.constant 2.500000e-01 : f32
    %31 = vector.broadcast %cst_13 : f32 to vector<4x384xf32>
    %32 = arith.mulf %31, %1 : vector<4x384xf32>
    %cst_14 = arith.constant 1.000000e+00 : f32
    %33 = vector.broadcast %cst_14 : f32 to vector<4x384xf32>
    %34 = arith.subf %33, %1 : vector<4x384xf32>
    %cst_15 = arith.constant 7.500000e-01 : f32
    %35 = vector.broadcast %cst_15 : f32 to vector<4x384xf32>
    %36 = arith.mulf %35, %34 : vector<4x384xf32>
    %37 = arith.addf %32, %36 : vector<4x384xf32>
    %38 = arith.mulf %37, %21 : vector<4x384xf32>
    %39 = arith.mulf %30, %30 : vector<4x384xf32>
    %40 = arith.mulf %38, %39 : vector<4x384xf32>
    %41 = arith.mulf %40, %2 : vector<4x384xf32>
    %42 = vector.shape_cast %41 : vector<4x384xf32> to vector<1x4x384xf32>
    %cst_16 = arith.constant dense<0.000000e+00> : vector<1xf32>
    %43 = vector.multi_reduction <add>, %42, %cst_16 [1, 2] : vector<1x4x384xf32> to vector<1xf32>
    %44 = vector.shape_cast %43 : vector<1xf32> to vector<1x1x1xf32>
    %45 = vector.extract %44[0, 0, 0] : f32 from vector<1x1x1xf32>
    %c0_17 = arith.constant 0 : index
    %c0_18 = arith.constant 0 : index
    %c0_19 = arith.constant 0 : index
    %46 = vector.load %arg4[%c0_17, %c0_18, %c0_19] : memref<2x7x384xf32, #tpu.memory_space<vmem>>, vector<2x7x384xf32>
    %c0_20 = arith.constant 0 : index
    %c0_21 = arith.constant 0 : index
    %c0_22 = arith.constant 0 : index
    %47 = vector.load %arg5[%c0_20, %c0_21, %c0_22] : memref<2x7x384xf32, #tpu.memory_space<vmem>>, vector<2x7x384xf32>
    %c0_23 = arith.constant 0 : index
    %c0_24 = arith.constant 0 : index
    %c0_25 = arith.constant 0 : index
    %48 = vector.load %arg6[%c0_23, %c0_24, %c0_25] : memref<2x1x384xf32, #tpu.memory_space<vmem>>, vector<2x1x384xf32>
    %49 = arith.subf %46, %47 : vector<2x7x384xf32>
    %50 = math.absf %49 : vector<2x7x384xf32>
    %cst_26 = arith.constant 1.000000e+00 : f32
    %51 = vector.broadcast %cst_26 : f32 to vector<2x7x384xf32>
    %52 = arith.cmpf olt, %50, %51 : vector<2x7x384xf32>
    %cst_27 = arith.constant 5.000000e-01 : f32
    %53 = vector.broadcast %cst_27 : f32 to vector<2x7x384xf32>
    %54 = arith.mulf %53, %49 : vector<2x7x384xf32>
    %55 = arith.mulf %54, %49 : vector<2x7x384xf32>
    %cst_28 = arith.constant 5.000000e-01 : f32
    %56 = vector.broadcast %cst_28 : f32 to vector<2x7x384xf32>
    %57 = arith.subf %50, %56 : vector<2x7x384xf32>
    %58 = arith.select %52, %55, %57 : vector<2x7x384xi1>, vector<2x7x384xf32>
    %59 = vector.extract_strided_slice %58 {offsets = [0, 0, 0], sizes = [2, 3, 384], strides = [1, 1, 1]} : vector<2x7x384xf32> to vector<2x3x384xf32>
    %60 = vector.extract_strided_slice %58 {offsets = [0, 3, 0], sizes = [2, 3, 384], strides = [1, 1, 1]} : vector<2x7x384xf32> to vector<2x3x384xf32>
    %61 = arith.addf %59, %60 : vector<2x3x384xf32>
    %62 = vector.extract_strided_slice %58 {offsets = [0, 6, 0], sizes = [2, 1, 384], strides = [1, 1, 1]} : vector<2x7x384xf32> to vector<2x1x384xf32>
    %cst_29 = arith.constant 0.318309873 : f32
    %63 = vector.broadcast %cst_29 : f32 to vector<2x1x384xf32>
    %64 = arith.mulf %62, %63 : vector<2x1x384xf32>
    %65 = vector.broadcast %64 : vector<2x1x384xf32> to vector<2x3x384xf32>
    %66 = arith.addf %61, %65 : vector<2x3x384xf32>
    %67 = vector.broadcast %48 : vector<2x1x384xf32> to vector<2x3x384xf32>
    %68 = arith.mulf %66, %67 : vector<2x3x384xf32>
    %69 = vector.shape_cast %68 : vector<2x3x384xf32> to vector<1x2x3x384xf32>
    %cst_30 = arith.constant dense<0.000000e+00> : vector<1xf32>
    %70 = vector.multi_reduction <add>, %69, %cst_30 [1, 2, 3] : vector<1x2x3x384xf32> to vector<1xf32>
    %71 = vector.shape_cast %70 : vector<1xf32> to vector<1x1x1x1xf32>
    %72 = vector.extract %71[0, 0, 0, 0] : f32 from vector<1x1x1x1xf32>
    %73 = vector.shape_cast %48 : vector<2x1x384xf32> to vector<1x2x1x384xf32>
    %cst_31 = arith.constant dense<0.000000e+00> : vector<1xf32>
    %74 = vector.multi_reduction <add>, %73, %cst_31 [1, 2, 3] : vector<1x2x1x384xf32> to vector<1xf32>
    %75 = vector.shape_cast %74 : vector<1xf32> to vector<1x1x1x1xf32>
    %76 = vector.extract %75[0, 0, 0, 0] : f32 from vector<1x1x1x1xf32>
    %77 = tpu.iota {dimensions = array<i32: 2>} : vector<1x8x128xi32>
    %c0_i32 = arith.constant 0 : i32
    %78 = vector.broadcast %c0_i32 : i32 to vector<1x8x128xi32>
    %79 = arith.cmpi eq, %77, %78 : vector<1x8x128xi32>
    %cst_32 = arith.constant 0.000000e+00 : f32
    %80 = vector.broadcast %45 : f32 to vector<1x8x128xf32>
    %81 = vector.broadcast %cst_32 : f32 to vector<1x8x128xf32>
    %82 = arith.select %79, %80, %81 : vector<1x8x128xi1>, vector<1x8x128xf32>
    %c1_i32 = arith.constant 1 : i32
    %83 = vector.broadcast %c1_i32 : i32 to vector<1x8x128xi32>
    %84 = arith.cmpi eq, %77, %83 : vector<1x8x128xi32>
    %cst_33 = arith.constant 0.000000e+00 : f32
    %85 = vector.broadcast %72 : f32 to vector<1x8x128xf32>
    %86 = vector.broadcast %cst_33 : f32 to vector<1x8x128xf32>
    %87 = arith.select %84, %85, %86 : vector<1x8x128xi1>, vector<1x8x128xf32>
    %88 = arith.addf %82, %87 : vector<1x8x128xf32>
    %c2_i32 = arith.constant 2 : i32
    %89 = vector.broadcast %c2_i32 : i32 to vector<1x8x128xi32>
    %90 = arith.cmpi eq, %77, %89 : vector<1x8x128xi32>
    %cst_34 = arith.constant 0.000000e+00 : f32
    %91 = vector.broadcast %76 : f32 to vector<1x8x128xf32>
    %92 = vector.broadcast %cst_34 : f32 to vector<1x8x128xf32>
    %93 = arith.select %90, %91, %92 : vector<1x8x128xi1>, vector<1x8x128xf32>
    %94 = arith.addf %88, %93 : vector<1x8x128xf32>
    %c0_35 = arith.constant 0 : index
    %c0_36 = arith.constant 0 : index
    %c0_37 = arith.constant 0 : index
    %95 = vector.load %arg7[%c0_35, %c0_36, %c0_37] : memref<1x8x128xf32, #tpu.memory_space<vmem>>, vector<1x8x128xf32>
    tpu.vector_store %arg7[%c0_35, %c0_36, %c0_37], %94 {strides = array<i32>} : memref<1x8x128xf32, #tpu.memory_space<vmem>>, vector<1x8x128xf32>,
    return
  }
  func.func @transform_0(%arg0: i32) -> (i32, i32) {
    %c0_i32 = arith.constant 0 : i32
    %c0_i32_0 = arith.constant 0 : i32
    return %c0_i32, %arg0 : i32, i32
  }
  func.func @transform_1(%arg0: i32) -> (i32, i32) {
    %c0_i32 = arith.constant 0 : i32
    %c0_i32_0 = arith.constant 0 : i32
    return %c0_i32, %arg0 : i32, i32
  }
  func.func @transform_2(%arg0: i32) -> (i32, i32) {
    %c0_i32 = arith.constant 0 : i32
    %c0_i32_0 = arith.constant 0 : i32
    return %c0_i32, %arg0 : i32, i32
  }
  func.func @transform_3(%arg0: i32) -> (i32, i32, i32) {
    %c0_i32 = arith.constant 0 : i32
    %c0_i32_0 = arith.constant 0 : i32
    %c0_i32_1 = arith.constant 0 : i32
    return %c0_i32, %c0_i32_0, %arg0 : i32, i32, i32
  }
  func.func @transform_4(%arg0: i32) -> (i32, i32, i32) {
    %c0_i32 = arith.constant 0 : i32
    %c0_i32_0 = arith.constant 0 : i32
    %c0_i32_1 = arith.constant 0 : i32
    return %c0_i32, %c0_i32_0, %arg0 : i32, i32, i32
  }
  func.func @transform_5(%arg0: i32) -> (i32, i32, i32) {
    %c0_i32 = arith.constant 0 : i32
    %c0_i32_0 = arith.constant 0 : i32
    %c0_i32_1 = arith.constant 0 : i32
    return %c0_i32, %c0_i32_0, %arg0 : i32, i32, i32
  }
  func.func @transform_6(%arg0: i32) -> (i32, i32, i32) {
    %c0_i32 = arith.constant 0 : i32
    %c0_i32_0 = arith.constant 0 : i32
    %c0_i32_1 = arith.constant 0 : i32
    return %arg0, %c0_i32, %c0_i32_0 : i32, i32, i32
  }
}

</mosaic_0001>

<llo_original>
// kernel: tpu_custom_call.1
$region0: #{tpu_custom_call.1}
  #allocation0 [shape = 'u32[]', space=smem, size = 0x4, offset = 0x4, fixed_abs, tag = 'smem constant byte address 0x4 - core index']
  #allocation1 [shape = 'u32[144,128]{1,0:T(1,128)}', space=vmem, size = 0x12000, scoped, tag = 'internal scratch']
  %s0 = inlined_call_operand.vmem [shape: f32[4,384], index: 0, kind: input, shape index: {}]
  %s1 = inlined_call_operand.vmem [shape: f32[4,384], index: 1, kind: input, shape index: {}]
  %s2 = inlined_call_operand.vmem [shape: f32[4,384], index: 2, kind: input, shape index: {}]
  %s3 = inlined_call_operand.vmem [shape: f32[2,7,384], index: 3, kind: input, shape index: {}]
  %s4 = inlined_call_operand.vmem [shape: f32[2,7,384], index: 4, kind: input, shape index: {}]
  %s5 = inlined_call_operand.vmem [shape: f32[2,1,384], index: 5, kind: input, shape index: {}]
  %s6 = inlined_call_operand.hbm [shape: f32[1,8,128], index: 6, kind: output, shape index: {}]
  %s7 = sld [smem:[#allocation0]]
  $region34: #{tpu_custom_call.1} parent=0
    _
  %s9 = ssub.s32 1, %s7
  %s10 = scalar_select 0, %s9, %s7
  $region1: #{tpu_custom_call.1} parent=0
    #allocation2 [shape = 'u8[4096]{0}', space=vmem, size = 0x1000, scoped, tag = 'output window, operand 0, single buffered']
    #allocation3 [shape = 's32[1]{0}', space=sflag, size = 0x4, scoped, tag = 'scoped memory for tpu_custom_call.1']
    %11 = vsyncpa [#allocation3], 0
    // Predicated region
    $region2: #{tpu_custom_call.1} parent=1 // pred_check
      _
    $region3: #{tpu_custom_call.1} parent=1 // pred_check_branch
      %13 = sbr.rel (0) target = $region5
    $region4: #{tpu_custom_call.1} parent=1 // pred_region
      _
    $region5: #{tpu_custom_call.1} parent=1 // pred_fallthru
      _
    // Predicated region
    $region6: #{tpu_custom_call.1} parent=1 // pred_check
      _
    $region7: #{tpu_custom_call.1} parent=1 // pred_check_branch
      %15 = sbr.rel (0) target = $region9
    $region8: #{tpu_custom_call.1} parent=1 // pred_region
      _
    $region9: #{tpu_custom_call.1} parent=1 // pred_fallthru
      _
    // Predicated region
    $region10: #{tpu_custom_call.1} parent=1 // pred_check
      _
    $region11: #{tpu_custom_call.1} parent=1 // pred_check_branch
      %17 = sbr.rel (0) target = $region13
    $region12: #{tpu_custom_call.1} parent=1 // pred_region
      _
    $region13: #{tpu_custom_call.1} parent=1 // pred_fallthru
      _
    // Predicated region
    $region14: #{tpu_custom_call.1} parent=1 // pred_check
      _
    $region15: #{tpu_custom_call.1} parent=1 // pred_check_branch
      %19 = sbr.rel (0) target = $region17
    $region16: #{tpu_custom_call.1} parent=1 // pred_region
      _
    $region17: #{tpu_custom_call.1} parent=1 // pred_fallthru
      _
    // Predicated region
    $region18: #{tpu_custom_call.1} parent=1 // pred_check
      _
    $region19: #{tpu_custom_call.1} parent=1 // pred_check_branch
      %21 = sbr.rel (0) target = $region21
    $region20: #{tpu_custom_call.1} parent=1 // pred_region
      _
    $region21: #{tpu_custom_call.1} parent=1 // pred_fallthru
      _
    // Predicated region
    $region22: #{tpu_custom_call.1} parent=1 // pred_check
      _
    $region23: #{tpu_custom_call.1} parent=1 // pred_check_branch
      %23 = sbr.rel (0) target = $region25
    $region24: #{tpu_custom_call.1} parent=1 // pred_region
      _
    $region25: #{tpu_custom_call.1} parent=1 // pred_fallthru
      _
    %v24 = vld [vmem:[%s0] sm:$0xff]
    %v25 = vld [vmem:[%s0 + $0x8] sm:$0xf]
    %v26 = vld [vmem:[%s1] sm:$0xff]
    %v27 = vld [vmem:[%s1 + $0x8] sm:$0xf]
    %v28 = vld [vmem:[%s2] sm:$0xff]
    %v29 = vld [vmem:[%s2 + $0x8] sm:$0xf]
    %v30 = vand.u32 2147483647, %v24
    %v31 = vand.u32 2147483647, %v25
    %v32 = vsub.f32 0.0, %v30
    %v33 = vsub.f32 0.0, %v31
    %v34 = vmul.f32 %v32, 1.442695
    %v35 = vpow.pop %v34
    %v36 = vmul.f32 %v33, 1.442695
    %v37 = vpow.pop %v36
    %v38 = vadd.f32 %v35, 1.0
    %v39 = vadd.f32 %v37, 1.0
    %v40 = vrcp.pop %v38
    %v41 = vmul.f32 1.0, %v40
    %v42 = vrcp.pop %v39
    %v43 = vmul.f32 1.0, %v42
    %vm44 = vcmp.ge.f32.partialorder %v24, 0.0
    %vm45 = vcmp.ge.f32.partialorder %v25, 0.0
    %v46 = vsel %vm44, 1.0, %v35
    %v47 = vsel %vm45, 1.0, %v37
    %v48 = vmul.f32 %v46, %v41
    %v49 = vmul.f32 %v47, %v43
    %v50 = vmax.f32 %v24, 0.0
    %v51 = vmax.f32 %v25, 0.0
    %v52 = vmul.f32 %v24, %v26
    %v53 = vmul.f32 %v25, %v27
    %v54 = vsub.f32 %v50, %v52
    %v55 = vsub.f32 %v51, %v53
    %v56 = vadd.f32 %v35, 1.0
    %v57 = vlog2.pop %v56
    %v58 = vmul.f32 %v57, 0.6931472
    %v59 = vmul.f32 -0.5, %v35
    %v60 = vadd.f32 %v59, 1.0
    %v61 = vmul.f32 %v60, %v35
    %v62 = vand.u32 2147483647, %v35
    %vm63 = vcmp.lt.f32.partialorder %v62, 0.0004427343
    %v64 = vsel %vm63, %v61, %v58
    %v65 = vadd.f32 %v37, 1.0
    %v66 = vlog2.pop %v65
    %v67 = vmul.f32 %v66, 0.6931472
    %v68 = vmul.f32 -0.5, %v37
    %v69 = vadd.f32 %v68, 1.0
    %v70 = vmul.f32 %v69, %v37
    %v71 = vand.u32 2147483647, %v37
    %vm72 = vcmp.lt.f32.partialorder %v71, 0.0004427343
    %v73 = vsel %vm72, %v70, %v67
    %v74 = vadd.f32 %v54, %v64
    %v75 = vadd.f32 %v55, %v73
    %v76 = vmul.f32 %v48, %v26
    %v77 = vmul.f32 %v49, %v27
    %v78 = vsub.f32 1.0, %v48
    %v79 = vsub.f32 1.0, %v49
    %v80 = vsub.f32 1.0, %v26
    %v81 = vsub.f32 1.0, %v27
    %v82 = vmul.f32 %v78, %v80
    %v83 = vmul.f32 %v79, %v81
    %v84 = vadd.f32 %v76, %v82
    %v85 = vadd.f32 %v77, %v83
    %v86 = vsub.f32 1.0, %v84
    %v87 = vsub.f32 1.0, %v85
    %v88 = vmul.f32 %v26, 0.25
    %v89 = vmul.f32 %v27, 0.25
    %v90 = vmul.f32 %v80, 0.75
    %v91 = vmul.f32 %v81, 0.75
    %v92 = vadd.f32 %v88, %v90
    %v93 = vadd.f32 %v89, %v91
    %v94 = vmul.f32 %v92, %v74
    %v95 = vmul.f32 %v93, %v75
    %v96 = vmul.f32 %v86, %v86
    %v97 = vmul.f32 %v87, %v87
    %v98 = vmul.f32 %v94, %v96
    %v99 = vmul.f32 %v95, %v97
    %v100 = vmul.f32 %v98, %v28
    %v101 = vmul.f32 %v99, %v29
    %v103 = vcombine.high %v100, %v100
    %vm105 = vcmask 1043456
    %v106 = vsel %vm105, %v100, 0.0
    %v107 = vsel %vm105, %v103, 0.0
    %v108 = vadd.f32 %v106, %v107
    %v109 = vsel %vm105, %v101, 0.0
    %v110 = vadd.f32 %v108, %v109
    %111 = vadd.xlane.f32.xlu0 %v110
    %v112 = vpop.xlane.xlu0 %111
    %v113 = vrot.slane %v112, 4
    %v114 = vadd.f32 %v112, %v113
    %v115 = vrot.slane %v114, 2
    %v116 = vadd.f32 %v114, %v115
    %v117 = vrot.slane %v116, 1
    %v118 = vadd.f32 %v116, %v117
    %s119 = vtos %v118
    %v120 = vld [vmem:[%s3] sm:$0x7f]
    %v121 = vld [vmem:[%s3 + $0x8] sm:$0x7f]
    %v122 = vld [vmem:[%s3 + $0x10] sm:$0x7f]
    %v123 = vld [vmem:[%s3 + $0x18] sm:$0x7f]
    %v124 = vld [vmem:[%s3 + $0x20] sm:$0x7f]
    %v125 = vld [vmem:[%s3 + $0x28] sm:$0x7f]
    %v126 = vld [vmem:[%s4] sm:$0x7f]
    %v127 = vld [vmem:[%s4 + $0x8] sm:$0x7f]
    %v128 = vld [vmem:[%s4 + $0x10] sm:$0x7f]
    %v129 = vld [vmem:[%s4 + $0x18] sm:$0x7f]
    %v130 = vld [vmem:[%s4 + $0x20] sm:$0x7f]
    %v131 = vld [vmem:[%s4 + $0x28] sm:$0x7f]
    %v132 = vld [vmem:[%s5] sm:$0x7]
    %v133 = vld [vmem:[%s5 + $0x3] sm:$0x7]
    %v134 = vsub.f32 %v120, %v126
    %v135 = vsub.f32 %v121, %v127
    %v136 = vsub.f32 %v122, %v128
    %v137 = vsub.f32 %v123, %v129
    %v138 = vsub.f32 %v124, %v130
    %v139 = vsub.f32 %v125, %v131
    %v140 = vand.u32 2147483647, %v134
    %v141 = vand.u32 2147483647, %v135
    %v142 = vand.u32 2147483647, %v136
    %v143 = vand.u32 2147483647, %v137
    %v144 = vand.u32 2147483647, %v138
    %v145 = vand.u32 2147483647, %v139
    %vm146 = vcmp.lt.f32.partialorder %v140, 1.0
    %vm147 = vcmp.lt.f32.partialorder %v141, 1.0
    %vm148 = vcmp.lt.f32.partialorder %v142, 1.0
    %vm149 = vcmp.lt.f32.partialorder %v143, 1.0
    %vm150 = vcmp.lt.f32.partialorder %v144, 1.0
    %vm151 = vcmp.lt.f32.partialorder %v145, 1.0
    %v152 = vmul.f32 %v134, 0.5
    %v153 = vmul.f32 %v135, 0.5
    %v154 = vmul.f32 %v136, 0.5
    %v155 = vmul.f32 %v137, 0.5
    %v156 = vmul.f32 %v138, 0.5
    %v157 = vmul.f32 %v139, 0.5
    %v158 = vmul.f32 %v152, %v134
    %v159 = vmul.f32 %v153, %v135
    %v160 = vmul.f32 %v154, %v136
    %v161 = vmul.f32 %v155, %v137
    %v162 = vmul.f32 %v156, %v138
    %v163 = vmul.f32 %v157, %v139
    %v164 = vsub.f32 %v140, 0.5
    %v165 = vsub.f32 %v141, 0.5
    %v166 = vsub.f32 %v142, 0.5
    %v167 = vsub.f32 %v143, 0.5
    %v168 = vsub.f32 %v144, 0.5
    %v169 = vsub.f32 %v145, 0.5
    %v170 = vsel %vm146, %v158, %v164
    %v171 = vsel %vm147, %v159, %v165
    %v172 = vsel %vm148, %v160, %v166
    %v173 = vsel %vm149, %v161, %v167
    %v174 = vsel %vm150, %v162, %v168
    %v175 = vsel %vm151, %v163, %v169
    %v182 = vrot.slane %v170, 3
    %v183 = vrot.slane %v171, 3
    %v184 = vrot.slane %v172, 3
    %v185 = vrot.slane %v173, 3
    %v186 = vrot.slane %v174, 3
    %v187 = vrot.slane %v175, 3
    %v194 = vadd.f32 %v170, %v182
    %v195 = vadd.f32 %v171, %v183
    %v196 = vadd.f32 %v172, %v184
    %v197 = vadd.f32 %v173, %v185
    %v198 = vadd.f32 %v174, %v186
    %v199 = vadd.f32 %v175, %v187
    %v200 = vmul.f32 %v170, 0.31830987
    %v201 = vmul.f32 %v171, 0.31830987
    %v202 = vmul.f32 %v172, 0.31830987
    %v203 = vmul.f32 %v173, 0.31830987
    %v204 = vmul.f32 %v174, 0.31830987
    %v205 = vmul.f32 %v175, 0.31830987
    %v206 = vlaneseq
    %v207 = vshrl.u32 %v206, 7
    %v208 = vsub.s32 6, %v207
    %v209 = vrot.slane %v200, %v208
    %v210 = vlaneseq
    %v211 = vshrl.u32 %v210, 7
    %v212 = vsub.s32 6, %v211
    %v213 = vrot.slane %v201, %v212
    %v214 = vlaneseq
    %v215 = vshrl.u32 %v214, 7
    %v216 = vsub.s32 6, %v215
    %v217 = vrot.slane %v202, %v216
    %v218 = vlaneseq
    %v219 = vshrl.u32 %v218, 7
    %v220 = vsub.s32 6, %v219
    %v221 = vrot.slane %v203, %v220
    %v222 = vlaneseq
    %v223 = vshrl.u32 %v222, 7
    %v224 = vsub.s32 6, %v223
    %v225 = vrot.slane %v204, %v224
    %v226 = vlaneseq
    %v227 = vshrl.u32 %v226, 7
    %v228 = vsub.s32 6, %v227
    %v229 = vrot.slane %v205, %v228
    %v230 = vadd.f32 %v194, %v209
    %v231 = vadd.f32 %v195, %v213
    %v232 = vadd.f32 %v196, %v217
    %v233 = vadd.f32 %v197, %v221
    %v234 = vadd.f32 %v198, %v225
    %v235 = vadd.f32 %v199, %v229
    %v238 = vlaneseq
    %v239 = vshrl.u32 %v238, 7
    %v240 = vsub.s32 0, %v239
    %v241 = vrot.slane %v132, %v240
    %v242 = vlaneseq
    %v243 = vshrl.u32 %v242, 7
    %v244 = vsub.s32 1, %v243
    %v245 = vrot.slane %v132, %v244
    %v246 = vlaneseq
    %v247 = vshrl.u32 %v246, 7
    %v248 = vsub.s32 2, %v247
    %v249 = vrot.slane %v132, %v248
    %v250 = vlaneseq
    %v251 = vshrl.u32 %v250, 7
    %v252 = vsub.s32 0, %v251
    %v253 = vrot.slane %v133, %v252
    %v254 = vlaneseq
    %v255 = vshrl.u32 %v254, 7
    %v256 = vsub.s32 1, %v255
    %v257 = vrot.slane %v133, %v256
    %v258 = vlaneseq
    %v259 = vshrl.u32 %v258, 7
    %v260 = vsub.s32 2, %v259
    %v261 = vrot.slane %v133, %v260
    %v268 = vmul.f32 %v230, %v241
    %v269 = vmul.f32 %v231, %v245
    %v270 = vmul.f32 %v232, %v249
    %v271 = vmul.f32 %v233, %v253
    %v272 = vmul.f32 %v234, %v257
    %v273 = vmul.f32 %v235, %v261
    %vm274 = vcmask 1042432
    %v275 = vsel %vm274, %v268, 0.0
    %v276 = vsel %vm274, %v269, 0.0
    %v277 = vadd.f32 %v275, %v276
    %v278 = vsel %vm274, %v270, 0.0
    %v279 = vadd.f32 %v277, %v278
    %v280 = vsel %vm274, %v271, 0.0
    %v281 = vadd.f32 %v279, %v280
    %v282 = vsel %vm274, %v272, 0.0
    %v283 = vadd.f32 %v281, %v282
    %v284 = vsel %vm274, %v273, 0.0
    %v285 = vadd.f32 %v283, %v284
    %286 = vadd.xlane.f32.xlu0 %v285
    %v287 = vpop.xlane.xlu0 %286
    %v288 = vrot.slane %v287, 4
    %v289 = vadd.f32 %v287, %v288
    %v290 = vrot.slane %v289, 2
    %v291 = vadd.f32 %v289, %v290
    %v292 = vrot.slane %v291, 1
    %v293 = vadd.f32 %v291, %v292
    %s294 = vtos %v293
    %vm295 = vcmask 1040384
    %v296 = vsel %vm295, %v241, 0.0
    %v297 = vsel %vm295, %v245, 0.0
    %v298 = vadd.f32 %v296, %v297
    %v299 = vsel %vm295, %v249, 0.0
    %v300 = vadd.f32 %v298, %v299
    %v301 = vsel %vm295, %v253, 0.0
    %v302 = vadd.f32 %v300, %v301
    %v303 = vsel %vm295, %v257, 0.0
    %v304 = vadd.f32 %v302, %v303
    %v305 = vsel %vm295, %v261, 0.0
    %v306 = vadd.f32 %v304, %v305
    %307 = vadd.xlane.f32.xlu0 %v306
    %v308 = vpop.xlane.xlu0 %307
    %v309 = vrot.slane %v308, 4
    %v310 = vadd.f32 %v308, %v309
    %v311 = vrot.slane %v310, 2
    %v312 = vadd.f32 %v310, %v311
    %v313 = vrot.slane %v312, 1
    %v314 = vadd.f32 %v312, %v313
    %s315 = vtos %v314
    %v316 = vlaneseq
    %v317 = vand.u32 %v316, 127
    %vm318 = vcmp.eq.s32.totalorder %v317, 0
    %v319 = vstv %s119
    %v320 = vsel %vm318, %v319, 0.0
    %vm321 = vcmp.eq.s32.totalorder %v317, 1
    %v322 = vstv %s294
    %v323 = vsel %vm321, %v322, 0.0
    %v324 = vadd.f32 %v320, %v323
    %vm325 = vcmp.eq.s32.totalorder %v317, 2
    %v326 = vstv %s315
    %v327 = vsel %vm325, %v326, 0.0
    %v328 = vadd.f32 %v324, %v327
    %329 = vst [vmem:[#allocation2] sm:$0xff] %v328
    // Predicated region
    $region26: #{tpu_custom_call.1} parent=1 // pred_check
      _
    $region27: #{tpu_custom_call.1} parent=1 // pred_check_branch
      %331 = sbr.rel (0) target = $region29
    $region28: #{tpu_custom_call.1} parent=1 // pred_region
      %s333 = ssub.s32 128, 128
      %334 = vsyncadd [#allocation3], %s333
      %s336 = sshll.u32 [#allocation2], 4
      %s337 = int_to_ptr.vmem [resolvable:$true] %s336
      %339 = dma.vmem_to_hbm [thread:$0]  %s337, 128, %s6, [#allocation3]
    $region29: #{tpu_custom_call.1} parent=1 // pred_fallthru
      _
    // Predicated region
    $region30: #{tpu_custom_call.1} parent=1 // pred_check
      _
    $region31: #{tpu_custom_call.1} parent=1 // pred_check_branch
      %341 = sbr.rel (0) target = $region33
    $region32: #{tpu_custom_call.1} parent=1 // pred_region
      %342 = dma.done [#allocation3], 128
    $region33: #{tpu_custom_call.1} parent=1 // pred_fallthru
      _
    %343 = vsyncpa [#allocation3], 1

</llo_original>
